<compile_context>
chip_gen: v5e
topology: v5e:2x2
jax: 0.10.0
libtpu: 0.0.40
codegen_flags: <defaults>
</compile_context>

<pallas_src>
import functools

import jax
import jax.numpy as jnp
from jax.experimental import pallas as pl
from jax.experimental.pallas import tpu as pltpu


def _softmax_pair(l):
    """Numerically-stable (softmax, log_softmax) with one exp and one log pass."""
    m = jnp.max(l, axis=-1, keepdims=True)
    e = jnp.exp(l - m)
    s = jnp.sum(e, axis=-1, keepdims=True)
    p = e * pl.reciprocal(s, approx=True)     # EUP slot, not a VALU divide
    logp = (l - m) - jnp.log(s)
    return p, logp


def _rdrop_kernel(logits1_ref, logits2_ref, labels_ref, out_ref, *,
                  ce_scale, kl_scale, block_rows, num_classes):
    """One batch tile -> one lane-dense partial row (1, C). No cross-step state."""
    l1 = logits1_ref[...].astype(jnp.float32)          # (TB, C)
    l2 = logits2_ref[...].astype(jnp.float32)          # (TB, C)
    labels = labels_ref[...]                            # (TB, 1) int32 (-1 on pad rows)

    p1, logp1 = _softmax_pair(l1)
    p2, logp2 = _softmax_pair(l2)

    # One-hot gather via iota compare; ce_scale folded directly into the select.
    # Padded rows carry label = -1 -> no hit -> zero CE contribution.
    class_ids = jax.lax.broadcasted_iota(jnp.int32, (block_rows, num_classes), 1)
    onehot_scaled = jnp.where(class_ids == labels, jnp.float32(ce_scale), 0.0)

    # Single pre-scaled term:
    #   CE:  ce_scale * onehot * (logp1 + logp2)          (ce_scale = -0.5/B)
    #   KL:  kl_scale * (p1 - p2) * (logp1 - logp2)       (kl_scale = alpha*0.5/(B*C))
    # Padded rows have zero logits -> p1 == p2, logp1 == logp2 -> KL term is 0.
    t = (onehot_scaled * (logp1 + logp2)
         + jnp.float32(kl_scale) * ((p1 - p2) * (logp1 - logp2)))

    # Sublane-only reduce; the single cross-lane reduce happens once, in the wrapper.
    out_ref[0] = jnp.sum(t, axis=0, keepdims=True)       # (1, C)


def _round_up(x, m):
    return ((x + m - 1) // m) * m


def _vmem_caps():
    """(working-set budget, hard vmem_limit cap) — generation aware."""
    try:
        phys = int(pltpu.get_tpu_info().vmem_capacity_bytes)
    except Exception:
        phys = 64 * 1024 * 1024            # conservative default (v7x per-TC VMEM)
    budget = min(48 * 1024 * 1024, max(8 * 1024 * 1024, phys // 2))
    hard = max(budget, phys - 16 * 1024 * 1024)
    return budget, hard


def _pick_block_rows(batch, num_classes, in_itemsize, budget_bytes):
    # bf16 packs 16 rows per sublane group (32 for 8-bit); keep blocks aligned.
    gran = {4: 8, 2: 16, 1: 32}.get(int(in_itemsize), 8)

    # Working set per row: 2 inputs x 2 pipeline buffers x itemsize*C
    #                      + ~8 live f32 (TB, C) temporaries.
    per_row = num_classes * (4 * in_itemsize + 8 * 4)
    cap_rows = max(gran, (budget_bytes // max(per_row, 1)) // gran * gran)

    # Target ~1M elements per input tile so DMA >> per-grid-step fixed overhead.
    target_rows = max(gran, ((1 << 20) // max(num_classes, 1)) // gran * gran)

    tb = min(cap_rows, target_rows)
    b_up = _round_up(batch, gran)
    tb = min(tb, b_up)
    if tb >= batch:
        return b_up                          # single block covering the whole batch

    # Prefer a divisor of batch near the target so no padding copy is needed.
    if batch % tb != 0:
        lower = max(gran, (tb // 2) // gran * gran)
        for d in range(tb, lower - 1, -gran):
            if batch % d == 0:
                return d
    return tb


def rdrop_loss(logits1, logits2, labels, *, alpha=0.5, block_rows=None):
    """R-Drop loss (reduction='mean').

    logits1, logits2: (B, C) float — bfloat16 recommended (this kernel is
    HBM-streaming bound on v5e/v6e, so bf16 inputs roughly halve wall clock;
    f32 inputs are supported but halve throughput). labels: (B,) int.
    Returns a scalar float32 loss.
    """
    B, C = logits1.shape
    in_itemsize = jnp.dtype(logits1.dtype).itemsize
    budget, hard_cap = _vmem_caps()

    tb = (_pick_block_rows(B, C, in_itemsize, budget)
          if block_rows is None else int(block_rows))
    B_pad = _round_up(B, tb)
    grid = B_pad // tb

    labels_2d = labels.astype(jnp.int32).reshape(B, 1)
    if B_pad != B:
        pad = B_pad - B
        logits1 = jnp.pad(logits1, ((0, pad), (0, 0)))                      # zero logits
        logits2 = jnp.pad(logits2, ((0, pad), (0, 0)))
        labels_2d = jnp.pad(labels_2d, ((0, pad), (0, 0)), constant_values=-1)

    # Scales use the *real* batch size; padded rows contribute exactly zero.
    ce_scale = -0.5 / float(B)
    kl_scale = float(alpha) * 0.5 / (float(B) * float(C))

    working = tb * C * (4 * in_itemsize + 8 * 4) + (1 << 20)   # inputs + f32 temps + slack
    vmem_limit = int(min(hard_cap, max(budget, int(1.25 * working))))

    cost = pl.CostEstimate(
        flops=20 * B_pad * C,
        transcendentals=2 * B_pad * C + 4 * B_pad,
        bytes_accessed=2 * B_pad * C * in_itemsize + B_pad * 4 + grid * C * 4,
    )

    partials = pl.pallas_call(
        functools.partial(_rdrop_kernel, ce_scale=ce_scale, kl_scale=kl_scale,
                          block_rows=tb, num_classes=C),
        out_shape=jax.ShapeDtypeStruct((grid, 1, C), jnp.float32),
        grid_spec=pltpu.PrefetchScalarGridSpec(
            num_scalar_prefetch=0,
            grid=(grid,),
            in_specs=[
                pl.BlockSpec((tb, C), lambda i: (i, 0)),
                pl.BlockSpec((tb, C), lambda i: (i, 0)),
                pl.BlockSpec((tb, 1), lambda i: (i, 0)),
            ],
            out_specs=pl.BlockSpec((1, 1, C), lambda i: (i, 0, 0)),
        ),
        compiler_params=pltpu.CompilerParams(
            dimension_semantics=("parallel",),   # lets v7x split blocks across both TCs
            vmem_limit_bytes=vmem_limit,
        ),
        cost_estimate=cost,
    )(logits1, logits2, labels_2d)

    # Tiny final reduction (grid*C elements) + pairwise-summation accuracy for free.
    return jnp.sum(partials, dtype=jnp.float32)


def _rdrop_loss_ref(logits1, logits2, labels, *, alpha=0.5):
    # pure-JAX reference for sanity checking
    logp1 = jax.nn.log_softmax(logits1.astype(jnp.float32), axis=-1)
    logp2 = jax.nn.log_softmax(logits2.astype(jnp.float32), axis=-1)
    p1, p2 = jnp.exp(logp1), jnp.exp(logp2)
    onehot = jax.nn.one_hot(labels, logits1.shape[-1], dtype=jnp.float32)
    ce = 0.5 * (-jnp.mean(jnp.sum(onehot * logp1, -1))
                - jnp.mean(jnp.sum(onehot * logp2, -1)))
    p_loss = jnp.mean(p2 * (logp2 - logp1))
    q_loss = jnp.mean(p1 * (logp1 - logp2))
    return ce + alpha * 0.5 * (p_loss + q_loss)


if __name__ == "__main__":
    key = jax.random.PRNGKey(0)
    k1, k2, k3 = jax.random.split(key, 3)

    # Non-multiple batch exercises the padding path; explicit small block_rows
    # exercises the multi-block parallel grid.
    B, C = 50, 96
    logits1 = jax.random.normal(k1, (B, C), dtype=jnp.float32)
    logits2 = jax.random.normal(k2, (B, C), dtype=jnp.float32)
    labels = jax.random.randint(k3, (B,), 0, C, dtype=jnp.int32)
    ref = _rdrop_loss_ref(logits1, logits2, labels, alpha=0.5)

    # Auto-picked block size (single block for this small batch).
    loss_auto = rdrop_loss(logits1, logits2, labels, alpha=0.5)
    jax.block_until_ready(loss_auto)
    assert jnp.allclose(loss_auto, ref, atol=1e-4, rtol=1e-4), (loss_auto, ref)

    # Forced small blocks -> 4 parallel grid steps + padded last block.
    loss_tiled = rdrop_loss(logits1, logits2, labels, alpha=0.5, block_rows=16)
    jax.block_until_ready(loss_tiled)
    assert jnp.allclose(loss_tiled, ref, atol=1e-4, rtol=1e-4), (loss_tiled, ref)

    # bf16 inputs end-to-end (recommended path: halves HBM traffic); f32 math inside.
    l1_bf16 = logits1.astype(jnp.bfloat16)
    l2_bf16 = logits2.astype(jnp.bfloat16)
    loss_bf16 = rdrop_loss(l1_bf16, l2_bf16, labels, alpha=0.5, block_rows=16)
    jax.block_until_ready(loss_bf16)
    ref_bf16 = _rdrop_loss_ref(l1_bf16, l2_bf16, labels, alpha=0.5)
    assert jnp.allclose(loss_bf16, ref_bf16, atol=1e-3, rtol=1e-3), (loss_bf16, ref_bf16)

    print("KERNEL_OK")
</pallas_src>

<mosaic_0001>
module attributes {stable_mosaic.version = 11 : i64} {
  func.func @_rdrop_kernel(%arg0: i32, %arg1: memref<56x96xf32, #tpu.memory_space<vmem>>, %arg2: memref<56x96xf32, #tpu.memory_space<vmem>>, %arg3: memref<56x1xi32, #tpu.memory_space<vmem>>, %arg4: memref<1x1x96xf32, #tpu.memory_space<vmem>>) attributes {dimension_semantics = [#tpu.dimension_semantics<parallel>], iteration_bounds = array<i64: 1>, scalar_prefetch = 0 : i64, scratch_operands = 0 : i64, tpu.core_type = #tpu.core_type<tc>, window_params = [{transform_indices = @transform_0, window_bounds = array<i64: 56, 96>}, {transform_indices = @transform_1, window_bounds = array<i64: 56, 96>}, {transform_indices = @transform_2, window_bounds = array<i64: 56, 1>}, {transform_indices = @transform_3, window_bounds = array<i64: 1, 1, 96>}]} {
    %c0 = arith.constant 0 : index
    %c0_0 = arith.constant 0 : index
    %0 = vector.load %arg1[%c0, %c0_0] : memref<56x96xf32, #tpu.memory_space<vmem>>, vector<56x96xf32>
    %c0_1 = arith.constant 0 : index
    %c0_2 = arith.constant 0 : index
    %1 = vector.load %arg2[%c0_1, %c0_2] : memref<56x96xf32, #tpu.memory_space<vmem>>, vector<56x96xf32>
    %c0_3 = arith.constant 0 : index
    %c0_4 = arith.constant 0 : index
    %2 = vector.load %arg3[%c0_3, %c0_4] : memref<56x1xi32, #tpu.memory_space<vmem>>, vector<56x1xi32>
    %cst = arith.constant dense<0xFF800000> : vector<56xf32>
    %3 = vector.multi_reduction <maximumf>, %0, %cst [1] : vector<56x96xf32> to vector<56xf32>
    %4 = vector.shape_cast %3 : vector<56xf32> to vector<56x1xf32>
    %5 = vector.broadcast %4 : vector<56x1xf32> to vector<56x96xf32>
    %6 = arith.subf %0, %5 : vector<56x96xf32>
    %7 = math.exp %6 : vector<56x96xf32>
    %cst_5 = arith.constant dense<0.000000e+00> : vector<56xf32>
    %8 = vector.multi_reduction <add>, %7, %cst_5 [1] : vector<56x96xf32> to vector<56xf32>
    %9 = vector.shape_cast %8 : vector<56xf32> to vector<56x1xf32>
    %10 = tpu.reciprocal %9 {approx = true} : vector<56x1xf32> -> vector<56x1xf32>
    %11 = vector.broadcast %10 : vector<56x1xf32> to vector<56x96xf32>
    %12 = arith.mulf %7, %11 : vector<56x96xf32>
    %13 = vector.broadcast %4 : vector<56x1xf32> to vector<56x96xf32>
    %14 = arith.subf %0, %13 : vector<56x96xf32>
    %15 = math.log %9 : vector<56x1xf32>
    %16 = vector.broadcast %15 : vector<56x1xf32> to vector<56x96xf32>
    %17 = arith.subf %14, %16 : vector<56x96xf32>
    %cst_6 = arith.constant dense<0xFF800000> : vector<56xf32>
    %18 = vector.multi_reduction <maximumf>, %1, %cst_6 [1] : vector<56x96xf32> to vector<56xf32>
    %19 = vector.shape_cast %18 : vector<56xf32> to vector<56x1xf32>
    %20 = vector.broadcast %19 : vector<56x1xf32> to vector<56x96xf32>
    %21 = arith.subf %1, %20 : vector<56x96xf32>
    %22 = math.exp %21 : vector<56x96xf32>
    %cst_7 = arith.constant dense<0.000000e+00> : vector<56xf32>
    %23 = vector.multi_reduction <add>, %22, %cst_7 [1] : vector<56x96xf32> to vector<56xf32>
    %24 = vector.shape_cast %23 : vector<56xf32> to vector<56x1xf32>
    %25 = tpu.reciprocal %24 {approx = true} : vector<56x1xf32> -> vector<56x1xf32>
    %26 = vector.broadcast %25 : vector<56x1xf32> to vector<56x96xf32>
    %27 = arith.mulf %22, %26 : vector<56x96xf32>
    %28 = vector.broadcast %19 : vector<56x1xf32> to vector<56x96xf32>
    %29 = arith.subf %1, %28 : vector<56x96xf32>
    %30 = math.log %24 : vector<56x1xf32>
    %31 = vector.broadcast %30 : vector<56x1xf32> to vector<56x96xf32>
    %32 = arith.subf %29, %31 : vector<56x96xf32>
    %33 = tpu.iota {dimensions = array<i32: 1>} : vector<56x96xi32>
    %34 = vector.broadcast %2 : vector<56x1xi32> to vector<56x96xi32>
    %35 = arith.cmpi eq, %33, %34 : vector<56x96xi32>
    %cst_8 = arith.constant -0.00999999977 : f32
    %cst_9 = arith.constant 0.000000e+00 : f32
    %36 = vector.broadcast %cst_8 : f32 to vector<56x96xf32>
    %37 = vector.broadcast %cst_9 : f32 to vector<56x96xf32>
    %38 = arith.select %35, %36, %37 : vector<56x96xi1>, vector<56x96xf32>
    %39 = arith.addf %17, %32 : vector<56x96xf32>
    %40 = arith.mulf %38, %39 : vector<56x96xf32>
    %41 = arith.subf %12, %27 : vector<56x96xf32>
    %42 = arith.subf %17, %32 : vector<56x96xf32>
    %43 = arith.mulf %41, %42 : vector<56x96xf32>
    %cst_10 = arith.constant 5.20833346E-5 : f32
    %44 = vector.broadcast %cst_10 : f32 to vector<56x96xf32>
    %45 = arith.mulf %44, %43 : vector<56x96xf32>
    %46 = arith.addf %40, %45 : vector<56x96xf32>
    %cst_11 = arith.constant dense<0.000000e+00> : vector<96xf32>
    %47 = vector.multi_reduction <add>, %46, %cst_11 [0] : vector<56x96xf32> to vector<96xf32>
    %48 = vector.shape_cast %47 : vector<96xf32> to vector<1x96xf32>
    %c0_12 = arith.constant 0 : index
    %c0_13 = arith.constant 0 : index
    %c0_14 = arith.constant 0 : index
    %49 = vector.load %arg4[%c0_12, %c0_13, %c0_14] : memref<1x1x96xf32, #tpu.memory_space<vmem>>, vector<1x1x96xf32>
    %50 = vector.shape_cast %49 : vector<1x1x96xf32> to vector<1x96xf32>
    %51 = vector.shape_cast %48 : vector<1x96xf32> to vector<1x1x96xf32>
    tpu.vector_store %arg4[%c0_12, %c0_13, %c0_14], %51 {strides = array<i32>} : memref<1x1x96xf32, #tpu.memory_space<vmem>>, vector<1x1x96xf32>,
    return
  }
  func.func @transform_0(%arg0: i32) -> (i32, i32) {
    %c0_i32 = arith.constant 0 : i32
    %c0_i32_0 = arith.constant 0 : i32
    return %arg0, %c0_i32 : i32, i32
  }
  func.func @transform_1(%arg0: i32) -> (i32, i32) {
    %c0_i32 = arith.constant 0 : i32
    %c0_i32_0 = arith.constant 0 : i32
    return %arg0, %c0_i32 : i32, i32
  }
  func.func @transform_2(%arg0: i32) -> (i32, i32) {
    %c0_i32 = arith.constant 0 : i32
    %c0_i32_0 = arith.constant 0 : i32
    return %arg0, %c0_i32 : i32, i32
  }
  func.func @transform_3(%arg0: i32) -> (i32, i32, i32) {
    %c0_i32 = arith.constant 0 : i32
    %c0_i32_0 = arith.constant 0 : i32
    %c0_i32_1 = arith.constant 0 : i32
    return %arg0, %c0_i32, %c0_i32_0 : i32, i32, i32
  }
}

</mosaic_0001>

<llo_original>
// kernel: tpu_custom_call.1
$region0: #{tpu_custom_call.1}
  #allocation0 [shape = 'u32[]', space=smem, size = 0x4, offset = 0x4, fixed_abs, tag = 'smem constant byte address 0x4 - core index']
  #allocation1 [shape = 'u32[72,128]{1,0:T(1,128)}', space=vmem, size = 0x9000, scoped, tag = 'internal scratch']
  %s0 = inlined_call_operand.vmem [shape: f32[56,96], index: 0, kind: input, shape index: {}]
  %s1 = inlined_call_operand.hbm [shape: f32[56,96], index: 1, kind: input, shape index: {}]
  %s2 = inlined_call_operand.vmem [shape: s32[56,1], index: 2, kind: input, shape index: {}]
  %s3 = inlined_call_operand.hbm [shape: f32[1,1,96], index: 3, kind: output, shape index: {}]
  %s4 = sld [smem:[#allocation0]]
  $region26: #{tpu_custom_call.1} parent=0
    _
  %s6 = ssub.s32 1, %s4
  %s7 = scalar_select 0, %s6, %s4
  $region1: #{tpu_custom_call.1} parent=0
    #allocation2 [shape = 'u8[28672]{0}', space=vmem, size = 0x7000, scoped, tag = 'input window, operand 1, single buffered']
    #allocation3 [shape = 's32[1]{0}', space=sflag, size = 0x4, scoped, tag = 'scoped memory for tpu_custom_call.1']
    #allocation4 [shape = 's32[1]{0}', space=sflag, size = 0x4, scoped, tag = 'scoped memory for tpu_custom_call.1']
    #allocation5 [shape = 'u8[512]{0}', space=vmem, size = 0x400, scoped, tag = 'output window, operand 0, single buffered']
    %8 = vsyncpa [#allocation3], 0
    %9 = vsyncpa [#allocation4], 0
    // Predicated region
    $region2: #{tpu_custom_call.1} parent=1 // pred_check
      _
    $region3: #{tpu_custom_call.1} parent=1 // pred_check_branch
      %11 = sbr.rel (0) target = $region5
    $region4: #{tpu_custom_call.1} parent=1 // pred_region
      _
    $region5: #{tpu_custom_call.1} parent=1 // pred_fallthru
      _
    // Predicated region
    $region6: #{tpu_custom_call.1} parent=1 // pred_check
      _
    $region7: #{tpu_custom_call.1} parent=1 // pred_check_branch
      %13 = sbr.rel (0) target = $region9
    $region8: #{tpu_custom_call.1} parent=1 // pred_region
      %15 = vsyncadd [#allocation3], 0
      %s16 = sshll.u32 %s1, 4
      %s17 = int_to_ptr.hbm [resolvable:$true] %s16
      %s18 = sshll.u32 [#allocation2], 4
      %s19 = int_to_ptr.vmem [resolvable:$true] %s18
      %24 = dma.hbm_to_vmem [thread:$0]  %s17, 896, %s19, [#allocation3], 128, 128, 8
    $region9: #{tpu_custom_call.1} parent=1 // pred_fallthru
      _
    // Predicated region
    $region10: #{tpu_custom_call.1} parent=1 // pred_check
      _
    $region11: #{tpu_custom_call.1} parent=1 // pred_check_branch
      %26 = sbr.rel (0) target = $region13
    $region12: #{tpu_custom_call.1} parent=1 // pred_region
      _
    $region13: #{tpu_custom_call.1} parent=1 // pred_fallthru
      _
    // Predicated region
    $region14: #{tpu_custom_call.1} parent=1 // pred_check
      _
    $region15: #{tpu_custom_call.1} parent=1 // pred_check_branch
      %28 = sbr.rel (0) target = $region17
    $region16: #{tpu_custom_call.1} parent=1 // pred_region
      %30 = dma.done [#allocation3], 896
    $region17: #{tpu_custom_call.1} parent=1 // pred_fallthru
      _
    %v31 = vld [vmem:[%s0] sm:$0xff]
    %v32 = vld [vmem:[%s0 + $0x8] sm:$0xff]
    %v33 = vld [vmem:[%s0 + $0x10] sm:$0xff]
    %v34 = vld [vmem:[%s0 + $0x18] sm:$0xff]
    %v35 = vld [vmem:[%s0 + $0x20] sm:$0xff]
    %v36 = vld [vmem:[%s0 + $0x28] sm:$0xff]
    %v37 = vld [vmem:[%s0 + $0x30] sm:$0xff]
    %v38 = vld [vmem:[#allocation2] sm:$0xff]
    %v39 = vld [vmem:[#allocation2 + $0x8] sm:$0xff]
    %v40 = vld [vmem:[#allocation2 + $0x10] sm:$0xff]
    %v41 = vld [vmem:[#allocation2 + $0x18] sm:$0xff]
    %v42 = vld [vmem:[#allocation2 + $0x20] sm:$0xff]
    %v43 = vld [vmem:[#allocation2 + $0x28] sm:$0xff]
    %v44 = vld [vmem:[#allocation2 + $0x30] sm:$0xff]
    %v45 = vld [vmem:[%s2] sm:$0xff]
    %v46 = vld [vmem:[%s2 + $0x8] sm:$0xff]
    %v47 = vld [vmem:[%s2 + $0x10] sm:$0xff]
    %v48 = vld [vmem:[%s2 + $0x18] sm:$0xff]
    %v49 = vld [vmem:[%s2 + $0x20] sm:$0xff]
    %v50 = vld [vmem:[%s2 + $0x28] sm:$0xff]
    %v51 = vld [vmem:[%s2 + $0x30] sm:$0xff]
    %vm52 = vcmask 785408
    %v53 = vsel %vm52, %v31, -inf
    %54 = vmax.xlane.f32.xlu0 %v53
    %v55 = vpop.xlane.xlu0 %54
    %v56 = vsel %vm52, %v32, -inf
    %57 = vmax.xlane.f32.xlu0 %v56
    %v58 = vpop.xlane.xlu0 %57
    %v59 = vsel %vm52, %v33, -inf
    %60 = vmax.xlane.f32.xlu0 %v59
    %v61 = vpop.xlane.xlu0 %60
    %v62 = vsel %vm52, %v34, -inf
    %63 = vmax.xlane.f32.xlu0 %v62
    %v64 = vpop.xlane.xlu0 %63
    %v65 = vsel %vm52, %v35, -inf
    %66 = vmax.xlane.f32.xlu0 %v65
    %v67 = vpop.xlane.xlu0 %66
    %v68 = vsel %vm52, %v36, -inf
    %69 = vmax.xlane.f32.xlu0 %v68
    %v70 = vpop.xlane.xlu0 %69
    %v71 = vsel %vm52, %v37, -inf
    %72 = vmax.xlane.f32.xlu0 %v71
    %v73 = vpop.xlane.xlu0 %72
    %v74 = vsub.f32 %v31, %v55
    %v75 = vsub.f32 %v32, %v58
    %v76 = vsub.f32 %v33, %v61
    %v77 = vsub.f32 %v34, %v64
    %v78 = vsub.f32 %v35, %v67
    %v79 = vsub.f32 %v36, %v70
    %v80 = vsub.f32 %v37, %v73
    %v81 = vmul.f32 %v74, 1.442695
    %v82 = vpow.pop %v81
    %v83 = vmul.f32 %v75, 1.442695
    %v84 = vpow.pop %v83
    %v85 = vmul.f32 %v76, 1.442695
    %v86 = vpow.pop %v85
    %v87 = vmul.f32 %v77, 1.442695
    %v88 = vpow.pop %v87
    %v89 = vmul.f32 %v78, 1.442695
    %v90 = vpow.pop %v89
    %v91 = vmul.f32 %v79, 1.442695
    %v92 = vpow.pop %v91
    %v93 = vmul.f32 %v80, 1.442695
    %v94 = vpow.pop %v93
    %v95 = vsel %vm52, %v82, 0.0
    %96 = vadd.xlane.f32.xlu0 %v95
    %v97 = vpop.xlane.xlu0 %96
    %v98 = vsel %vm52, %v84, 0.0
    %99 = vadd.xlane.f32.xlu0 %v98
    %v100 = vpop.xlane.xlu0 %99
    %v101 = vsel %vm52, %v86, 0.0
    %102 = vadd.xlane.f32.xlu0 %v101
    %v103 = vpop.xlane.xlu0 %102
    %v104 = vsel %vm52, %v88, 0.0
    %105 = vadd.xlane.f32.xlu0 %v104
    %v106 = vpop.xlane.xlu0 %105
    %v107 = vsel %vm52, %v90, 0.0
    %108 = vadd.xlane.f32.xlu0 %v107
    %v109 = vpop.xlane.xlu0 %108
    %v110 = vsel %vm52, %v92, 0.0
    %111 = vadd.xlane.f32.xlu0 %v110
    %v112 = vpop.xlane.xlu0 %111
    %v113 = vsel %vm52, %v94, 0.0
    %114 = vadd.xlane.f32.xlu0 %v113
    %v115 = vpop.xlane.xlu0 %114
    %v116 = vrcp.pop %v97
    %v117 = vrcp.pop %v100
    %v118 = vrcp.pop %v103
    %v119 = vrcp.pop %v106
    %v120 = vrcp.pop %v109
    %v121 = vrcp.pop %v112
    %v122 = vrcp.pop %v115
    %v123 = vmul.f32 %v82, %v116
    %v124 = vmul.f32 %v84, %v117
    %v125 = vmul.f32 %v86, %v118
    %v126 = vmul.f32 %v88, %v119
    %v127 = vmul.f32 %v90, %v120
    %v128 = vmul.f32 %v92, %v121
    %v129 = vmul.f32 %v94, %v122
    %v130 = vlog2.pop %v97
    %v131 = vmul.f32 %v130, 0.6931472
    %v132 = vlog2.pop %v100
    %v133 = vmul.f32 %v132, 0.6931472
    %v134 = vlog2.pop %v103
    %v135 = vmul.f32 %v134, 0.6931472
    %v136 = vlog2.pop %v106
    %v137 = vmul.f32 %v136, 0.6931472
    %v138 = vlog2.pop %v109
    %v139 = vmul.f32 %v138, 0.6931472
    %v140 = vlog2.pop %v112
    %v141 = vmul.f32 %v140, 0.6931472
    %v142 = vlog2.pop %v115
    %v143 = vmul.f32 %v142, 0.6931472
    %v144 = vsub.f32 %v74, %v131
    %v145 = vsub.f32 %v75, %v133
    %v146 = vsub.f32 %v76, %v135
    %v147 = vsub.f32 %v77, %v137
    %v148 = vsub.f32 %v78, %v139
    %v149 = vsub.f32 %v79, %v141
    %v150 = vsub.f32 %v80, %v143
    %v151 = vsel %vm52, %v38, -inf
    %152 = vmax.xlane.f32.xlu0 %v151
    %v153 = vpop.xlane.xlu0 %152
    %v154 = vsel %vm52, %v39, -inf
    %155 = vmax.xlane.f32.xlu0 %v154
    %v156 = vpop.xlane.xlu0 %155
    %v157 = vsel %vm52, %v40, -inf
    %158 = vmax.xlane.f32.xlu0 %v157
    %v159 = vpop.xlane.xlu0 %158
    %v160 = vsel %vm52, %v41, -inf
    %161 = vmax.xlane.f32.xlu0 %v160
    %v162 = vpop.xlane.xlu0 %161
    %v163 = vsel %vm52, %v42, -inf
    %164 = vmax.xlane.f32.xlu0 %v163
    %v165 = vpop.xlane.xlu0 %164
    %v166 = vsel %vm52, %v43, -inf
    %167 = vmax.xlane.f32.xlu0 %v166
    %v168 = vpop.xlane.xlu0 %167
    %v169 = vsel %vm52, %v44, -inf
    %170 = vmax.xlane.f32.xlu0 %v169
    %v171 = vpop.xlane.xlu0 %170
    %v172 = vsub.f32 %v38, %v153
    %v173 = vsub.f32 %v39, %v156
    %v174 = vsub.f32 %v40, %v159
    %v175 = vsub.f32 %v41, %v162
    %v176 = vsub.f32 %v42, %v165
    %v177 = vsub.f32 %v43, %v168
    %v178 = vsub.f32 %v44, %v171
    %v179 = vmul.f32 %v172, 1.442695
    %v180 = vpow.pop %v179
    %v181 = vmul.f32 %v173, 1.442695
    %v182 = vpow.pop %v181
    %v183 = vmul.f32 %v174, 1.442695
    %v184 = vpow.pop %v183
    %v185 = vmul.f32 %v175, 1.442695
    %v186 = vpow.pop %v185
    %v187 = vmul.f32 %v176, 1.442695
    %v188 = vpow.pop %v187
    %v189 = vmul.f32 %v177, 1.442695
    %v190 = vpow.pop %v189
    %v191 = vmul.f32 %v178, 1.442695
    %v192 = vpow.pop %v191
    %v193 = vsel %vm52, %v180, 0.0
    %194 = vadd.xlane.f32.xlu0 %v193
    %v195 = vpop.xlane.xlu0 %194
    %v196 = vsel %vm52, %v182, 0.0
    %197 = vadd.xlane.f32.xlu0 %v196
    %v198 = vpop.xlane.xlu0 %197
    %v199 = vsel %vm52, %v184, 0.0
    %200 = vadd.xlane.f32.xlu0 %v199
    %v201 = vpop.xlane.xlu0 %200
    %v202 = vsel %vm52, %v186, 0.0
    %203 = vadd.xlane.f32.xlu0 %v202
    %v204 = vpop.xlane.xlu0 %203
    %v205 = vsel %vm52, %v188, 0.0
    %206 = vadd.xlane.f32.xlu0 %v205
    %v207 = vpop.xlane.xlu0 %206
    %v208 = vsel %vm52, %v190, 0.0
    %209 = vadd.xlane.f32.xlu0 %v208
    %v210 = vpop.xlane.xlu0 %209
    %v211 = vsel %vm52, %v192, 0.0
    %212 = vadd.xlane.f32.xlu0 %v211
    %v213 = vpop.xlane.xlu0 %212
    %v214 = vrcp.pop %v195
    %v215 = vrcp.pop %v198
    %v216 = vrcp.pop %v201
    %v217 = vrcp.pop %v204
    %v218 = vrcp.pop %v207
    %v219 = vrcp.pop %v210
    %v220 = vrcp.pop %v213
    %v221 = vmul.f32 %v180, %v214
    %v222 = vmul.f32 %v182, %v215
    %v223 = vmul.f32 %v184, %v216
    %v224 = vmul.f32 %v186, %v217
    %v225 = vmul.f32 %v188, %v218
    %v226 = vmul.f32 %v190, %v219
    %v227 = vmul.f32 %v192, %v220
    %v228 = vlog2.pop %v195
    %v229 = vmul.f32 %v228, 0.6931472
    %v230 = vlog2.pop %v198
    %v231 = vmul.f32 %v230, 0.6931472
    %v232 = vlog2.pop %v201
    %v233 = vmul.f32 %v232, 0.6931472
    %v234 = vlog2.pop %v204
    %v235 = vmul.f32 %v234, 0.6931472
    %v236 = vlog2.pop %v207
    %v237 = vmul.f32 %v236, 0.6931472
    %v238 = vlog2.pop %v210
    %v239 = vmul.f32 %v238, 0.6931472
    %v240 = vlog2.pop %v213
    %v241 = vmul.f32 %v240, 0.6931472
    %v242 = vsub.f32 %v172, %v229
    %v243 = vsub.f32 %v173, %v231
    %v244 = vsub.f32 %v174, %v233
    %v245 = vsub.f32 %v175, %v235
    %v246 = vsub.f32 %v176, %v237
    %v247 = vsub.f32 %v177, %v239
    %v248 = vsub.f32 %v178, %v241
    %v249 = vlaneseq
    %v250 = vand.u32 %v249, 127
    %251 = vset.pattern.permute.xlu0 0
    %252 = vperm.xlu0 %251, %v45
    %v253 = vpop.permute.xlu0 %252
    %254 = vset.pattern.permute.xlu0 0
    %255 = vperm.xlu0 %254, %v46
    %v256 = vpop.permute.xlu0 %255
    %257 = vset.pattern.permute.xlu0 0
    %258 = vperm.xlu0 %257, %v47
    %v259 = vpop.permute.xlu0 %258
    %260 = vset.pattern.permute.xlu0 0
    %261 = vperm.xlu0 %260, %v48
    %v262 = vpop.permute.xlu0 %261
    %263 = vset.pattern.permute.xlu0 0
    %264 = vperm.xlu0 %263, %v49
    %v265 = vpop.permute.xlu0 %264
    %266 = vset.pattern.permute.xlu0 0
    %267 = vperm.xlu0 %266, %v50
    %v268 = vpop.permute.xlu0 %267
    %269 = vset.pattern.permute.xlu0 0
    %270 = vperm.xlu0 %269, %v51
    %v271 = vpop.permute.xlu0 %270
    %vm272 = vcmp.eq.s32.totalorder %v250, %v253
    %vm273 = vcmp.eq.s32.totalorder %v250, %v256
    %vm274 = vcmp.eq.s32.totalorder %v250, %v259
    %vm275 = vcmp.eq.s32.totalorder %v250, %v262
    %vm276 = vcmp.eq.s32.totalorder %v250, %v265
    %vm277 = vcmp.eq.s32.totalorder %v250, %v268
    %vm278 = vcmp.eq.s32.totalorder %v250, %v271
    %v279 = vsel %vm272, -0.01, 0.0
    %v280 = vsel %vm273, -0.01, 0.0
    %v281 = vsel %vm274, -0.01, 0.0
    %v282 = vsel %vm275, -0.01, 0.0
    %v283 = vsel %vm276, -0.01, 0.0
    %v284 = vsel %vm277, -0.01, 0.0
    %v285 = vsel %vm278, -0.01, 0.0
    %v286 = vadd.f32 %v144, %v242
    %v287 = vadd.f32 %v145, %v243
    %v288 = vadd.f32 %v146, %v244
    %v289 = vadd.f32 %v147, %v245
    %v290 = vadd.f32 %v148, %v246
    %v291 = vadd.f32 %v149, %v247
    %v292 = vadd.f32 %v150, %v248
    %v293 = vmul.f32 %v279, %v286
    %v294 = vmul.f32 %v280, %v287
    %v295 = vmul.f32 %v281, %v288
    %v296 = vmul.f32 %v282, %v289
    %v297 = vmul.f32 %v283, %v290
    %v298 = vmul.f32 %v284, %v291
    %v299 = vmul.f32 %v285, %v292
    %v300 = vsub.f32 %v123, %v221
    %v301 = vsub.f32 %v124, %v222
    %v302 = vsub.f32 %v125, %v223
    %v303 = vsub.f32 %v126, %v224
    %v304 = vsub.f32 %v127, %v225
    %v305 = vsub.f32 %v128, %v226
    %v306 = vsub.f32 %v129, %v227
    %v307 = vsub.f32 %v144, %v242
    %v308 = vsub.f32 %v145, %v243
    %v309 = vsub.f32 %v146, %v244
    %v310 = vsub.f32 %v147, %v245
    %v311 = vsub.f32 %v148, %v246
    %v312 = vsub.f32 %v149, %v247
    %v313 = vsub.f32 %v150, %v248
    %v314 = vmul.f32 %v300, %v307
    %v315 = vmul.f32 %v301, %v308
    %v316 = vmul.f32 %v302, %v309
    %v317 = vmul.f32 %v303, %v310
    %v318 = vmul.f32 %v304, %v311
    %v319 = vmul.f32 %v305, %v312
    %v320 = vmul.f32 %v306, %v313
    %v321 = vmul.f32 %v314, 5.2083335e-05
    %v322 = vmul.f32 %v315, 5.2083335e-05
    %v323 = vmul.f32 %v316, 5.2083335e-05
    %v324 = vmul.f32 %v317, 5.2083335e-05
    %v325 = vmul.f32 %v318, 5.2083335e-05
    %v326 = vmul.f32 %v319, 5.2083335e-05
    %v327 = vmul.f32 %v320, 5.2083335e-05
    %v328 = vadd.f32 %v293, %v321
    %v329 = vadd.f32 %v294, %v322
    %v330 = vadd.f32 %v295, %v323
    %v331 = vadd.f32 %v296, %v324
    %v332 = vadd.f32 %v297, %v325
    %v333 = vadd.f32 %v298, %v326
    %v334 = vadd.f32 %v299, %v327
    %v335 = vsel %vm52, %v328, 0.0
    %v336 = vsel %vm52, %v329, 0.0
    %v337 = vadd.f32 %v335, %v336
    %v338 = vsel %vm52, %v330, 0.0
    %v339 = vadd.f32 %v337, %v338
    %v340 = vsel %vm52, %v331, 0.0
    %v341 = vadd.f32 %v339, %v340
    %v342 = vsel %vm52, %v332, 0.0
    %v343 = vadd.f32 %v341, %v342
    %v344 = vsel %vm52, %v333, 0.0
    %v345 = vadd.f32 %v343, %v344
    %v346 = vsel %vm52, %v334, 0.0
    %v347 = vadd.f32 %v345, %v346
    %v348 = vrot.slane %v347, 4
    %v349 = vadd.f32 %v347, %v348
    %v350 = vrot.slane %v349, 2
    %v351 = vadd.f32 %v349, %v350
    %v352 = vrot.slane %v351, 1
    %v353 = vadd.f32 %v351, %v352
    %vm354 = vcmask 778240
    %355 = vst.msk [vmem:[#allocation5] sm:$0x1] %vm354, %v353
    // Predicated region
    $region18: #{tpu_custom_call.1} parent=1 // pred_check
      _
    $region19: #{tpu_custom_call.1} parent=1 // pred_check_branch
      %357 = sbr.rel (0) target = $region21
    $region20: #{tpu_custom_call.1} parent=1 // pred_region
      %359 = vsyncadd [#allocation4], 0
      %s361 = sshll.u32 [#allocation5], 4
      %s362 = int_to_ptr.vmem [resolvable:$true] %s361
      %s363 = sshll.u32 %s3, 4
      %s364 = int_to_ptr.hbm [resolvable:$true] %s363
      %366 = dma.vmem_to_hbm [thread:$0]  %s362, 16, %s364, [#allocation4]
    $region21: #{tpu_custom_call.1} parent=1 // pred_fallthru
      _
    // Predicated region
    $region22: #{tpu_custom_call.1} parent=1 // pred_check
      _
    $region23: #{tpu_custom_call.1} parent=1 // pred_check_branch
      %368 = sbr.rel (0) target = $region25
    $region24: #{tpu_custom_call.1} parent=1 // pred_region
      %370 = dma.done [#allocation4], 16
    $region25: #{tpu_custom_call.1} parent=1 // pred_fallthru
      _
    %371 = vsyncpa [#allocation3], 1
    %372 = vsyncpa [#allocation4], 1

</llo_original>
